<compile_context>
chip_gen: v5e
topology: v5e:2x2
jax: 0.10.0
libtpu: 0.0.40
codegen_flags: <defaults>
</compile_context>

<pallas_src>
import functools

import jax
import jax.numpy as jnp
from jax.experimental import pallas as pl
from jax.experimental.pallas import tpu as pltpu

COEF = 0.97  # flipped_filter buffer is [-coef, 1.0]


def _pre_emphasis_kernel(x_ref, o_ref, carry_ref, *, coef):
    # x_ref / o_ref: (tb, tt) tiles; carry_ref: (tb, 1) VMEM scratch holding
    # the last sample of the previous T tile for this batch block.
    x = x_ref[...]

    # First T tile of a batch block: reflect boundary -> prev of col 0 is x[:, 1].
    @pl.when(pl.program_id(1) == 0)
    def _():
        carry_ref[...] = x[:, 1:2]

    # prev[:, t] = x[:, t-1]; lane 0 comes from the carry.
    # XLU roll + VPU select instead of concatenating unaligned slices.
    prev = pltpu.roll(x, shift=1, axis=1)
    lane = jax.lax.broadcasted_iota(jnp.int32, x.shape, 1)
    prev = jnp.where(lane == 0, carry_ref[...], prev)

    # Carry this tile's last sample into the next T tile (T axis sequential).
    carry_ref[...] = x[:, -1:]

    # Compute in f32 in-vreg (free under the DMA bottleneck), store out dtype.
    y = x.astype(jnp.float32) - jnp.float32(coef) * prev.astype(jnp.float32)
    o_ref[...] = y.astype(o_ref.dtype)


def _choose_tiles(B, T, itemsize, block_b=None, block_t=None,
                  tile_bytes=2 * 1024 * 1024):
    """Pick (tb, tt): (8,128)-aligned when tiling, or the full dim otherwise."""
    if block_b is None:
        block_b = 128  # multiple of 8
    if block_t is None:
        # Aim for ~tile_bytes per input tile; keep lane dim a multiple of 128.
        lanes = (tile_bytes // (min(B, block_b) * itemsize)) // 128 * 128
        block_t = int(min(max(lanes, 128), 8192))  # cap per-step latency/VMEM
    tb = B if B <= block_b else block_b   # if tiling B, tb must be %8 == 0
    tt = T if T <= block_t else block_t   # if tiling T, tt must be %128 == 0
    return tb, tt


def pre_emphasis(x: jax.Array, coef: float = COEF,
                 block_b: int | None = None, block_t: int | None = None) -> jax.Array:
    assert x.ndim == 2, "The number of dimensions of inputs tensor must be 2!"
    B, T = x.shape
    assert T >= 2, "reflect padding requires T >= 2"

    tb, tt = _choose_tiles(B, T, jnp.dtype(x.dtype).itemsize, block_b, block_t)

    kernel = functools.partial(_pre_emphasis_kernel, coef=coef)
    return pl.pallas_call(
        kernel,
        out_shape=jax.ShapeDtypeStruct((B, T), x.dtype),
        grid_spec=pltpu.PrefetchScalarGridSpec(
            num_scalar_prefetch=0,
            grid=(pl.cdiv(B, tb), pl.cdiv(T, tt)),
            in_specs=[pl.BlockSpec((tb, tt), lambda i, j: (i, j))],
            out_specs=pl.BlockSpec((tb, tt), lambda i, j: (i, j)),
            scratch_shapes=[pltpu.VMEM((tb, 1), x.dtype)],
        ),
        compiler_params=pltpu.CompilerParams(
            # B axis independent (megacore-shardable); T axis sequential
            # (1-sample halo carried in VMEM scratch).
            dimension_semantics=("parallel", "arbitrary"),
        ),
    )(x)


def _reference(x: jax.Array, coef: float = COEF) -> jax.Array:
    padded = jnp.concatenate([x[:, 1:2], x], axis=1)  # reflect pad left by 1
    return padded[:, 1:] - coef * padded[:, :-1]


if __name__ == "__main__":
    root = jax.random.PRNGKey(0)
    k1, k2, k3 = jax.random.split(root, 3)

    # Case 1: module-sized toy input (single full-array block).
    x1 = jax.random.normal(k1, (2, 16), dtype=jnp.float32)
    o1 = jax.block_until_ready(pre_emphasis(x1))
    assert o1.shape == x1.shape and o1.dtype == x1.dtype
    assert jnp.allclose(o1, _reference(x1), atol=1e-6, rtol=1e-6)

    # Case 2: tiled path — multiple B blocks + T-halo carry (divisible dims).
    x2 = jax.random.normal(k2, (16, 512), dtype=jnp.float32)
    o2 = jax.block_until_ready(pre_emphasis(x2, block_b=8, block_t=128))
    assert jnp.allclose(o2, _reference(x2), atol=1e-6, rtol=1e-6)

    # Case 3: ragged dims -> partial edge blocks on both axes (no pad / copy).
    x3 = jax.random.normal(k3, (10, 300), dtype=jnp.float32)
    o3 = jax.block_until_ready(pre_emphasis(x3, block_b=8, block_t=128))
    assert jnp.allclose(o3, _reference(x3), atol=1e-6, rtol=1e-6)

    print("KERNEL_OK")
</pallas_src>

<mosaic_0001>
module attributes {stable_mosaic.version = 11 : i64} {
  func.func @_pre_emphasis_kernel(%arg0: i32, %arg1: i32, %arg2: memref<2x16xf32, #tpu.memory_space<vmem>>, %arg3: memref<2x16xf32, #tpu.memory_space<vmem>>, %arg4: memref<2x1xf32, #tpu.memory_space<vmem>>) attributes {dimension_semantics = [#tpu.dimension_semantics<parallel>, #tpu.dimension_semantics<arbitrary>], iteration_bounds = array<i64: 1, 1>, scalar_prefetch = 0 : i64, scratch_operands = 1 : i64, tpu.core_type = #tpu.core_type<tc>, window_params = [{transform_indices = @transform_0, window_bounds = array<i64: 2, 16>}, {transform_indices = @transform_1, window_bounds = array<i64: 2, 16>}]} {
    %c0 = arith.constant 0 : index
    %c0_0 = arith.constant 0 : index
    %0 = vector.load %arg2[%c0, %c0_0] : memref<2x16xf32, #tpu.memory_space<vmem>>, vector<2x16xf32>
    %c0_i32 = arith.constant 0 : i32
    %1 = arith.cmpi eq, %arg1, %c0_i32 : i32
    %2 = arith.extui %1 : i1 to i32
    %c0_i32_1 = arith.constant 0 : i32
    %3 = arith.cmpi ne, %2, %c0_i32_1 : i32
    scf.if %3 {
      %18 = vector.extract_strided_slice %0 {offsets = [0, 1], sizes = [2, 1], strides = [1, 1]} : vector<2x16xf32> to vector<2x1xf32>
      %c0_9 = arith.constant 0 : index
      %c0_10 = arith.constant 0 : index
      %19 = vector.load %arg4[%c0_9, %c0_10] : memref<2x1xf32, #tpu.memory_space<vmem>>, vector<2x1xf32>
      tpu.vector_store %arg4[%c0_9, %c0_10], %18 {strides = array<i32>} : memref<2x1xf32, #tpu.memory_space<vmem>>, vector<2x1xf32>,
    } else {
    }
    %c1_i32 = arith.constant 1 : i32
    %4 = tpu.dynamic_rotate %0 by %c1_i32 dim 1 : vector<2x16xf32>, i32 -> vector<2x16xf32>
    %5 = tpu.iota {dimensions = array<i32: 1>} : vector<2x16xi32>
    %c0_i32_2 = arith.constant 0 : i32
    %6 = vector.broadcast %c0_i32_2 : i32 to vector<2x16xi32>
    %7 = arith.cmpi eq, %5, %6 : vector<2x16xi32>
    %c0_3 = arith.constant 0 : index
    %c0_4 = arith.constant 0 : index
    %8 = vector.load %arg4[%c0_3, %c0_4] : memref<2x1xf32, #tpu.memory_space<vmem>>, vector<2x1xf32>
    %9 = vector.shape_cast %8 : vector<2x1xf32> to vector<2x1xf32>
    %10 = vector.broadcast %9 : vector<2x1xf32> to vector<2x16xf32>
    %11 = arith.select %7, %10, %4 : vector<2x16xi1>, vector<2x16xf32>
    %12 = vector.extract_strided_slice %0 {offsets = [0, 15], sizes = [2, 1], strides = [1, 1]} : vector<2x16xf32> to vector<2x1xf32>
    %c0_5 = arith.constant 0 : index
    %c0_6 = arith.constant 0 : index
    %13 = vector.load %arg4[%c0_5, %c0_6] : memref<2x1xf32, #tpu.memory_space<vmem>>, vector<2x1xf32>
    tpu.vector_store %arg4[%c0_5, %c0_6], %12 {strides = array<i32>} : memref<2x1xf32, #tpu.memory_space<vmem>>, vector<2x1xf32>,
    %cst = arith.constant 9.700000e-01 : f32
    %14 = vector.broadcast %cst : f32 to vector<2x16xf32>
    %15 = arith.mulf %14, %11 : vector<2x16xf32>
    %16 = arith.subf %0, %15 : vector<2x16xf32>
    %c0_7 = arith.constant 0 : index
    %c0_8 = arith.constant 0 : index
    %17 = vector.load %arg3[%c0_7, %c0_8] : memref<2x16xf32, #tpu.memory_space<vmem>>, vector<2x16xf32>
    tpu.vector_store %arg3[%c0_7, %c0_8], %16 {strides = array<i32>} : memref<2x16xf32, #tpu.memory_space<vmem>>, vector<2x16xf32>,
    return
  }
  func.func @transform_0(%arg0: i32, %arg1: i32) -> (i32, i32) {
    %c0_i32 = arith.constant 0 : i32
    return %arg0, %arg1 : i32, i32
  }
  func.func @transform_1(%arg0: i32, %arg1: i32) -> (i32, i32) {
    %c0_i32 = arith.constant 0 : i32
    return %arg0, %arg1 : i32, i32
  }
}

</mosaic_0001>

<llo_original>
// kernel: tpu_custom_call.1
$region0: #{tpu_custom_call.1}
  #allocation0 [shape = 'u32[]', space=smem, size = 0x4, offset = 0x4, fixed_abs, tag = 'smem constant byte address 0x4 - core index']
  #allocation1 [shape = 'u32[72,128]{1,0:T(1,128)}', space=vmem, size = 0x9000, scoped, tag = 'internal scratch']
  #allocation2 [shape = 'f32[2,1]{1,0:T(2,128)}', space=vmem, size = 0x400, scoped, tag = 'scratch operand']
  %s0 = inlined_call_operand.hbm [shape: f32[2,16], index: 0, kind: input, shape index: {}]
  %s1 = inlined_call_operand.hbm [shape: f32[2,16], index: 1, kind: output, shape index: {}]
  %s2 = sld [smem:[#allocation0]]
  $region22: #{tpu_custom_call.1} parent=0
    _
  %s4 = ssub.s32 1, %s2
  %s5 = scalar_select 0, %s4, %s2
  $region1: #{tpu_custom_call.1} parent=0
    #allocation3 [shape = 'u8[1024]{0}', space=vmem, size = 0x400, scoped, tag = 'input window, operand 0, single buffered']
    #allocation4 [shape = 's32[1]{0}', space=sflag, size = 0x4, scoped, tag = 'scoped memory for tpu_custom_call.1']
    #allocation5 [shape = 's32[1]{0}', space=sflag, size = 0x4, scoped, tag = 'scoped memory for tpu_custom_call.1']
    #allocation6 [shape = 'u8[1024]{0}', space=vmem, size = 0x400, scoped, tag = 'output window, operand 0, single buffered']
    %6 = vsyncpa [#allocation4], 0
    %7 = vsyncpa [#allocation5], 0
    // Predicated region
    $region2: #{tpu_custom_call.1} parent=1 // pred_check
      _
    $region3: #{tpu_custom_call.1} parent=1 // pred_check_branch
      %9 = sbr.rel (0) target = $region5
    $region4: #{tpu_custom_call.1} parent=1 // pred_region
      %11 = vsyncadd [#allocation4], 0
      %s13 = sshll.u32 %s0, 4
      %s14 = int_to_ptr.hbm [resolvable:$true] %s13
      %s15 = sshll.u32 [#allocation3], 4
      %s16 = int_to_ptr.vmem [resolvable:$true] %s15
      %18 = dma.hbm_to_vmem [thread:$0]  %s14, 32, %s16, [#allocation4]
    $region5: #{tpu_custom_call.1} parent=1 // pred_fallthru
      _
    // Predicated region
    $region6: #{tpu_custom_call.1} parent=1 // pred_check
      _
    $region7: #{tpu_custom_call.1} parent=1 // pred_check_branch
      %20 = sbr.rel (0) target = $region9
    $region8: #{tpu_custom_call.1} parent=1 // pred_region
      %22 = dma.done [#allocation4], 32
    $region9: #{tpu_custom_call.1} parent=1 // pred_fallthru
      _
    %v23 = vld [vmem:[#allocation3] sm:$0x3]
    %p24 = scmp.eq.s32.totalorder 0, 0
    // Predicated region
    $region10: #{tpu_custom_call.1} parent=1 // pred_check
      %p25 = pneg %p24
    $region11: #{tpu_custom_call.1} parent=1 // pred_check_branch
      %27 = sbr.rel (%p25) target = $region13
    $region12: #{tpu_custom_call.1} parent=1 // pred_region
      %29 = vrot.lane.b32.xlu0 %v23, 127
      %v30 = vpop.permute.xlu0 %29
      %vm32 = vcmask 1024
      %33 = vst.msk [vmem:[#allocation2] sm:$0x3] %vm32, %v30
    $region13: #{tpu_custom_call.1} parent=1 // pred_fallthru
      _
    %vm34 = vcmask 1047680
    %35 = vrot.lane.b32.xlu0 %v23, 16
    %v36 = vpop.permute.xlu0 %35
    %v37 = vsel %vm34, %v36, %v23
    %38 = vrot.lane.b32.xlu0 %v37, 16
    %v39 = vpop.permute.xlu0 %38
    %v40 = vsel %vm34, %v39, %v23
    %v41 = vlaneseq
    %v42 = vand.u32 %v41, 127
    %vm43 = vcmp.eq.s32.totalorder %v42, 0
    %v44 = vld [vmem:[#allocation2] sm:$0x3]
    %46 = vset.pattern.permute.xlu0 0
    %47 = vperm.xlu0 %46, %v44
    %v48 = vpop.permute.xlu0 %47
    %51 = vrot.lane.b32.xlu0 %v40, 113
    %v52 = vpop.permute.xlu0 %51
    %v54 = vsel %vm43, %v48, %v52
    %56 = vrot.lane.b32.xlu0 %v23, 113
    %v57 = vpop.permute.xlu0 %56
    %vm59 = vcmask 1024
    %60 = vst.msk [vmem:[#allocation2] sm:$0x3] %vm59, %v57
    %v61 = vmul.f32 %v54, 0.97
    %v62 = vsub.f32 %v23, %v61
    %vm63 = vcmask 123904
    %64 = vst.msk [vmem:[#allocation6] sm:$0x3] %vm63, %v62
    // Predicated region
    $region14: #{tpu_custom_call.1} parent=1 // pred_check
      _
    $region15: #{tpu_custom_call.1} parent=1 // pred_check_branch
      %66 = sbr.rel (0) target = $region17
    $region16: #{tpu_custom_call.1} parent=1 // pred_region
      %68 = vsyncadd [#allocation5], 0
      %s70 = sshll.u32 [#allocation6], 4
      %s71 = int_to_ptr.vmem [resolvable:$true] %s70
      %s72 = sshll.u32 %s1, 4
      %s73 = int_to_ptr.hbm [resolvable:$true] %s72
      %75 = dma.vmem_to_hbm [thread:$0]  %s71, 32, %s73, [#allocation5]
    $region17: #{tpu_custom_call.1} parent=1 // pred_fallthru
      _
    // Predicated region
    $region18: #{tpu_custom_call.1} parent=1 // pred_check
      _
    $region19: #{tpu_custom_call.1} parent=1 // pred_check_branch
      %77 = sbr.rel (0) target = $region21
    $region20: #{tpu_custom_call.1} parent=1 // pred_region
      %79 = dma.done [#allocation5], 32
    $region21: #{tpu_custom_call.1} parent=1 // pred_fallthru
      _
    %80 = vsyncpa [#allocation4], 1
    %81 = vsyncpa [#allocation5], 1

</llo_original>
